<compile_context>
chip_gen: v5e
topology: v5e:2x2
jax: 0.10.0
libtpu: 0.0.40
codegen_flags: <defaults>
</compile_context>

<pallas_src>
import math
import functools

import jax
import jax.numpy as jnp
from jax import lax
from jax.experimental import pallas as pl
from jax.experimental.pallas import tpu as pltpu


# ----------------------------------------------------------------------------
# Config helpers
# ----------------------------------------------------------------------------
def _choose_tile(dim, target, aligns):
    """Largest tile <= target that divides `dim` and is a multiple of one of
    `aligns` (tried in order); falls back to the full dimension."""
    if dim <= target:
        return dim
    for align in aligns:
        t = (target // align) * align
        while t >= align:
            if dim % t == 0:
                return t
            t -= align
    return dim


def _device_kind():
    try:
        return jax.devices()[0].device_kind.lower()
    except Exception:
        return ""


def _vmem_limit_bytes():
    """~75% of physical VMEM: ~96 MiB on 128-MiB parts (v5e/v6e), ~48 MiB on
    v7x; device-kind based fallback avoids under-provisioning 128-MiB parts."""
    cap = None
    try:
        cap = pltpu.get_tpu_info().vmem_capacity_bytes
    except Exception:
        cap = None
    if not cap:
        kind = _device_kind()
        cap = (64 if "v7" in kind else 128) * 1024 * 1024
    return int(min(cap * 3 // 4, 100 * 1024 * 1024))


def _use_bf16_exp():
    """bf16 EUP exists on v6e / v7x; keep f32 exp on older generations."""
    kind = _device_kind()
    if not kind:
        return False
    return not any(v in kind for v in ("v2", "v3", "v4", "v5"))


def prepare_params(params):
    """One-time parameter prep (do this OUTSIDE the per-forward path).

    Input params use the PyTorch nn.Linear layout: w* is (out, in), b* is (H,).
    Output: fused QKV weight (H, 3H) bf16 + bias (1, 3H) f32, and output-proj
    weight (H, H) bf16 + bias (1, H) f32 (weights transposed to (in, out)).
    """
    H = params["wq"].shape[0]
    wqkv = jnp.concatenate(
        [params["wq"].T, params["wk"].T, params["wv"].T], axis=1
    ).astype(jnp.bfloat16)                                       # (H, 3H)
    bqkv = jnp.concatenate(
        [params["bq"], params["bk"], params["bv"]]
    ).reshape(1, 3 * H).astype(jnp.float32)                      # (1, 3H)
    return {
        "wqkv": wqkv,
        "bqkv": bqkv,
        "wo": params["wo"].T.astype(jnp.bfloat16),               # (H, H)
        "bo": params["bo"].reshape(1, H).astype(jnp.float32),    # (1, H)
    }


# ----------------------------------------------------------------------------
# Kernel 1: fused QKV projection
# ----------------------------------------------------------------------------
def _qkv_projection_kernel(scale, H, x_ref, wqkv_ref, bqkv_ref,
                           q_ref, k_ref, v_ref):
    """Grid = (batch, row_tile).

    x_ref    : (1, tx, H) bf16
    wqkv_ref : (H, 3H)    bf16 (whole array, resident in VMEM once)
    bqkv_ref : (1, 3H)    f32
    outputs  : Q/K/V tiles (1, tx, H) bf16; Q is pre-scaled by 1/sqrt(H).
    """
    x = x_ref[0]                                                    # (tx, H)
    res = jnp.dot(x, wqkv_ref[...],
                  preferred_element_type=jnp.float32) + bqkv_ref[...]
    q_ref[0] = (res[:, :H] * scale).astype(q_ref.dtype)
    k_ref[0] = res[:, H:2 * H].astype(k_ref.dtype)
    v_ref[0] = res[:, 2 * H:].astype(v_ref.dtype)


# ----------------------------------------------------------------------------
# Kernel 2: flash attention (online softmax) + fused output projection
# ----------------------------------------------------------------------------
def _attention_kernel(use_bf16_exp,
                      q_ref, k_ref, v_ref, amask_ref, wo_ref, bo_ref,
                      o_ref,
                      m_scr, l_scr, acc_scr):
    """Grid = (batch, q_tile, kv_tile), kv axis innermost ("arbitrary").

    q_ref/k_ref/v_ref : (1, tq|tkv, H) bf16 (Q pre-scaled)
    amask_ref         : (1, 1, tkv)    f32  additive mask ((1-m) * -10000)
    wo_ref / bo_ref   : (H, H) bf16 / (1, H) f32 (resident, single copy)
    scratch           : m/l (tq,1) f32, acc (tq,H) f32
    """
    j = pl.program_id(2)

    @pl.when(j == 0)
    def _init():
        m_scr[...] = jnp.full_like(m_scr, -1e30)
        l_scr[...] = jnp.zeros_like(l_scr)
        acc_scr[...] = jnp.zeros_like(acc_scr)

    # scores (tq, tkv): contract H of both operands -- no explicit k.T.
    s = lax.dot_general(q_ref[0], k_ref[0],
                        dimension_numbers=(((1,), (1,)), ((), ())),
                        preferred_element_type=jnp.float32)
    s = s + amask_ref[0]            # (1, tkv) broadcasts over the query axis

    # Online softmax update.
    m_prev = m_scr[...]
    m_new = jnp.maximum(m_prev, jnp.max(s, axis=-1, keepdims=True))
    alpha = jnp.exp(m_prev - m_new)
    if use_bf16_exp:
        p = jnp.exp((s - m_new).astype(jnp.bfloat16))           # bf16 EUP
        p_sum = jnp.sum(p.astype(jnp.float32), axis=-1, keepdims=True)
    else:
        p_f32 = jnp.exp(s - m_new)
        p_sum = jnp.sum(p_f32, axis=-1, keepdims=True)
        p = p_f32.astype(jnp.bfloat16)
    l_scr[...] = alpha * l_scr[...] + p_sum
    acc_scr[...] = alpha * acc_scr[...] + jnp.dot(
        p, v_ref[0], preferred_element_type=jnp.float32)
    m_scr[...] = m_new

    # Dropout on attention probs: identity (eval mode).

    @pl.when(j == pl.num_programs(2) - 1)
    def _finalize():
        ctx = acc_scr[...] * pl.reciprocal(l_scr[...], approx=True)  # (tq, H)
        out = jnp.dot(ctx.astype(jnp.bfloat16), wo_ref[...],
                      preferred_element_type=jnp.float32) + bo_ref[...]
        o_ref[0] = out.astype(o_ref.dtype)


# ----------------------------------------------------------------------------
# Wrapper
# ----------------------------------------------------------------------------
def self_attention_layer(hidden_states, prepared_params, attention_mask=None):
    """Reproduces SelfAttentionLayer.forward (eval mode).

    hidden_states   : [B, S, H] (also accepts [B, D1, D2, H] or [B, H]).
    prepared_params : output of prepare_params().
    attention_mask  : [B, S] of 1.0/0.0, or None.
    """
    orig_shape = hidden_states.shape
    if len(orig_shape) == 4:
        b_, d1, d2, h_ = orig_shape
        hidden_states = hidden_states.reshape(b_, d1 * d2, h_)
    elif len(orig_shape) == 2:
        hidden_states = hidden_states[:, None, :]
    elif len(orig_shape) != 3:
        return hidden_states

    B, S, H = hidden_states.shape
    out_dtype = hidden_states.dtype
    p = prepared_params

    # PyTorch behavior: None mask or mismatched mask => no masking effect.
    if attention_mask is None or attention_mask.shape[1] != S:
        add_mask = jnp.zeros((B, 1, S), jnp.float32)
    else:
        add_mask = ((1.0 - attention_mask.astype(jnp.float32)) * (-10000.0)
                    ).reshape(B, 1, S)

    x_bf16 = hidden_states.astype(jnp.bfloat16)
    vmem_limit = _vmem_limit_bytes()
    scale = 1.0 / math.sqrt(H)

    # Constant weights/biases: whole array resident in VMEM, single copy
    # (no per-step double-buffering of constants).
    vmem_full = pl.BlockSpec(memory_space=pltpu.MemorySpace.VMEM)

    # ---- Pass 1: fused QKV projection -----------------------------------
    tx = _choose_tile(S, 512, (128, 16))
    nx = S // tx
    qkv_shape = jax.ShapeDtypeStruct((B, S, H), jnp.bfloat16)

    q_all, k_all, v_all = pl.pallas_call(
        functools.partial(_qkv_projection_kernel, scale, H),
        out_shape=(qkv_shape, qkv_shape, qkv_shape),
        grid_spec=pltpu.PrefetchScalarGridSpec(
            num_scalar_prefetch=0,
            grid=(B, nx),
            in_specs=[
                pl.BlockSpec((1, tx, H), lambda b, i: (b, i, 0)),   # x rows
                vmem_full,                                          # Wqkv
                vmem_full,                                          # bqkv
            ],
            out_specs=(
                pl.BlockSpec((1, tx, H), lambda b, i: (b, i, 0)),   # Q
                pl.BlockSpec((1, tx, H), lambda b, i: (b, i, 0)),   # K
                pl.BlockSpec((1, tx, H), lambda b, i: (b, i, 0)),   # V
            ),
        ),
        compiler_params=pltpu.CompilerParams(
            dimension_semantics=("parallel", "parallel"),
            vmem_limit_bytes=vmem_limit,
        ),
    )(x_bf16, p["wqkv"], p["bqkv"])

    # ---- Pass 2: flash attention + output projection ---------------------
    tq = _choose_tile(S, 256, (128, 16))
    tkv = _choose_tile(S, 512, (256, 128))
    nq = S // tq
    # Keep both TensorCores busy on v7x when B * nq would be 1.
    if B * nq < 2:
        half = tq // 2
        if half >= 16 and half % 16 == 0 and S % half == 0:
            tq = half
            nq = S // tq
    nkv = S // tkv

    out = pl.pallas_call(
        functools.partial(_attention_kernel, _use_bf16_exp()),
        out_shape=jax.ShapeDtypeStruct((B, S, H), out_dtype),
        grid_spec=pltpu.PrefetchScalarGridSpec(
            num_scalar_prefetch=0,
            grid=(B, nq, nkv),
            in_specs=[
                pl.BlockSpec((1, tq, H), lambda b, i, j: (b, i, 0)),   # Q
                pl.BlockSpec((1, tkv, H), lambda b, i, j: (b, j, 0)),  # K
                pl.BlockSpec((1, tkv, H), lambda b, i, j: (b, j, 0)),  # V
                pl.BlockSpec((1, 1, tkv), lambda b, i, j: (b, 0, j)),  # mask
                vmem_full,                                             # Wo
                vmem_full,                                             # bo
            ],
            out_specs=pl.BlockSpec((1, tq, H), lambda b, i, j: (b, i, 0)),
            scratch_shapes=[
                pltpu.VMEM((tq, 1), jnp.float32),    # running max m
                pltpu.VMEM((tq, 1), jnp.float32),    # running sum l
                pltpu.VMEM((tq, H), jnp.float32),    # running context acc
            ],
        ),
        compiler_params=pltpu.CompilerParams(
            dimension_semantics=("parallel", "parallel", "arbitrary"),
            vmem_limit_bytes=vmem_limit,
        ),
    )(q_all, k_all, v_all, add_mask, p["wo"], p["bo"])
    return out


# ----------------------------------------------------------------------------
# Pure-JAX reference (f32) of the PyTorch forward (eval mode)
# ----------------------------------------------------------------------------
def _reference(hidden_states, params, attention_mask=None):
    B, S, H = hidden_states.shape
    x = hidden_states.astype(jnp.float32)
    q = x @ params["wq"].T + params["bq"]
    k = x @ params["wk"].T + params["bk"]
    v = x @ params["wv"].T + params["bv"]
    scores = jnp.einsum("bqh,bkh->bqk", q, k) / math.sqrt(H)
    if attention_mask is not None:
        ext = (1.0 - attention_mask[:, None, :]) * -10000.0
        scores = scores + ext
    probs = jax.nn.softmax(scores, axis=-1)
    ctx = jnp.einsum("bqk,bkh->bqh", probs, v)
    return ctx @ params["wo"].T + params["bo"]


# ----------------------------------------------------------------------------
# Self-test
# ----------------------------------------------------------------------------
if __name__ == "__main__":
    key = jax.random.PRNGKey(0)

    def make_params(k, H):
        ks = jax.random.split(k, 8)
        s = 1.0 / math.sqrt(H)
        u = lambda kk, shape: jax.random.uniform(kk, shape, jnp.float32, -s, s)
        return {
            "wq": u(ks[0], (H, H)), "bq": u(ks[1], (H,)),
            "wk": u(ks[2], (H, H)), "bk": u(ks[3], (H,)),
            "wv": u(ks[4], (H, H)), "bv": u(ks[5], (H,)),
            "wo": u(ks[6], (H, H)), "bo": u(ks[7], (H,)),
        }

    k1, k2, k3, k4 = jax.random.split(key, 4)

    # --- test 1: small shape from the module spec (B=2, S=8, H=32) ---------
    B, S, H = 2, 8, 32
    params = make_params(k1, H)
    prepared = prepare_params(params)          # one-time, outside forward path
    x = jax.random.normal(k2, (B, S, H), jnp.float32)
    mask = jnp.ones((B, S), jnp.float32).at[1, -2:].set(0.0)

    out = jax.block_until_ready(self_attention_layer(x, prepared, mask))
    ref = _reference(x, params, mask)
    assert out.shape == (B, S, H)
    err = float(jnp.max(jnp.abs(out - ref)))
    assert jnp.allclose(out, ref, atol=3e-2, rtol=3e-2), ("small mismatch", err)

    # --- test 2: shape that exercises q/kv tiling + online softmax ---------
    B2, S2, H2 = 1, 1024, 128                  # tq=256, tkv=512 -> grid (1,4,2)
    params2 = make_params(k3, H2)
    prepared2 = prepare_params(params2)
    x2 = jax.random.normal(k4, (B2, S2, H2), jnp.float32)
    mask2 = jnp.ones((B2, S2), jnp.float32).at[0, -300:].set(0.0)

    out2 = jax.block_until_ready(self_attention_layer(x2, prepared2, mask2))
    ref2 = _reference(x2, params2, mask2)
    err2 = float(jnp.max(jnp.abs(out2 - ref2)))
    assert jnp.allclose(out2, ref2, atol=3e-2, rtol=3e-2), ("tiled mismatch", err2)

    print("KERNEL_OK")
</pallas_src>

<mosaic_0001>
module attributes {stable_mosaic.version = 11 : i64} {
  func.func @_qkv_projection_kernel(%arg0: i32, %arg1: i32, %arg2: memref<1x8x32xbf16, #tpu.memory_space<vmem>>, %arg3: memref<32x96xbf16, #tpu.memory_space<vmem>>, %arg4: memref<1x96xf32, #tpu.memory_space<vmem>>, %arg5: memref<1x8x32xbf16, #tpu.memory_space<vmem>>, %arg6: memref<1x8x32xbf16, #tpu.memory_space<vmem>>, %arg7: memref<1x8x32xbf16, #tpu.memory_space<vmem>>) attributes {dimension_semantics = [#tpu.dimension_semantics<parallel>, #tpu.dimension_semantics<parallel>], iteration_bounds = array<i64: 2, 1>, scalar_prefetch = 0 : i64, scratch_operands = 0 : i64, tpu.core_type = #tpu.core_type<tc>, window_params = [{transform_indices = @transform_0, window_bounds = array<i64: 1, 8, 32>}, {pipeline_mode = #tpu.pipeline_mode<synchronous>, transform_indices = @transform_1, window_bounds = array<i64: 32, 96>}, {pipeline_mode = #tpu.pipeline_mode<synchronous>, transform_indices = @transform_2, window_bounds = array<i64: 1, 96>}, {transform_indices = @transform_3, window_bounds = array<i64: 1, 8, 32>}, {transform_indices = @transform_4, window_bounds = array<i64: 1, 8, 32>}, {transform_indices = @transform_5, window_bounds = array<i64: 1, 8, 32>}]} {
    %c0 = arith.constant 0 : index
    %c0_0 = arith.constant 0 : index
    %c0_1 = arith.constant 0 : index
    %0 = vector.load %arg2[%c0, %c0_0, %c0_1] : memref<1x8x32xbf16, #tpu.memory_space<vmem>>, vector<1x8x32xbf16>
    %1 = vector.shape_cast %0 : vector<1x8x32xbf16> to vector<8x32xbf16>
    %c0_2 = arith.constant 0 : index
    %c0_3 = arith.constant 0 : index
    %2 = vector.load %arg3[%c0_2, %c0_3] : memref<32x96xbf16, #tpu.memory_space<vmem>>, vector<32x96xbf16>
    %cst = arith.constant dense<0.000000e+00> : vector<8x96xf32>
    %3 = tpu.matmul %1, %2, %cst {dimension_numbers = #tpu.dot_dimension_numbers<[1], [0], [0], [1], [0, 0, 1, 1], [], []>} : vector<8x32xbf16>, vector<32x96xbf16>, vector<8x96xf32> -> vector<8x96xf32>
    %c0_4 = arith.constant 0 : index
    %c0_5 = arith.constant 0 : index
    %4 = vector.load %arg4[%c0_4, %c0_5] : memref<1x96xf32, #tpu.memory_space<vmem>>, vector<1x96xf32>
    %5 = vector.broadcast %4 : vector<1x96xf32> to vector<8x96xf32>
    %6 = arith.addf %3, %5 : vector<8x96xf32>
    %7 = vector.extract_strided_slice %6 {offsets = [0, 0], sizes = [8, 32], strides = [1, 1]} : vector<8x96xf32> to vector<8x32xf32>
    %cst_6 = arith.constant 0.176776692 : f32
    %8 = vector.broadcast %cst_6 : f32 to vector<8x32xf32>
    %9 = arith.mulf %7, %8 : vector<8x32xf32>
    %10 = arith.truncf %9 : vector<8x32xf32> to vector<8x32xbf16>
    %c0_7 = arith.constant 0 : index
    %c0_8 = arith.constant 0 : index
    %c0_9 = arith.constant 0 : index
    %11 = vector.load %arg5[%c0_7, %c0_8, %c0_9] : memref<1x8x32xbf16, #tpu.memory_space<vmem>>, vector<1x8x32xbf16>
    %12 = vector.shape_cast %11 : vector<1x8x32xbf16> to vector<8x32xbf16>
    %13 = vector.shape_cast %10 : vector<8x32xbf16> to vector<1x8x32xbf16>
    tpu.vector_store %arg5[%c0_7, %c0_8, %c0_9], %13 {strides = array<i32>} : memref<1x8x32xbf16, #tpu.memory_space<vmem>>, vector<1x8x32xbf16>,
    %14 = vector.extract_strided_slice %6 {offsets = [0, 32], sizes = [8, 32], strides = [1, 1]} : vector<8x96xf32> to vector<8x32xf32>
    %15 = arith.truncf %14 : vector<8x32xf32> to vector<8x32xbf16>
    %c0_10 = arith.constant 0 : index
    %c0_11 = arith.constant 0 : index
    %c0_12 = arith.constant 0 : index
    %16 = vector.load %arg6[%c0_10, %c0_11, %c0_12] : memref<1x8x32xbf16, #tpu.memory_space<vmem>>, vector<1x8x32xbf16>
    %17 = vector.shape_cast %16 : vector<1x8x32xbf16> to vector<8x32xbf16>
    %18 = vector.shape_cast %15 : vector<8x32xbf16> to vector<1x8x32xbf16>
    tpu.vector_store %arg6[%c0_10, %c0_11, %c0_12], %18 {strides = array<i32>} : memref<1x8x32xbf16, #tpu.memory_space<vmem>>, vector<1x8x32xbf16>,
    %19 = vector.extract_strided_slice %6 {offsets = [0, 64], sizes = [8, 32], strides = [1, 1]} : vector<8x96xf32> to vector<8x32xf32>
    %20 = arith.truncf %19 : vector<8x32xf32> to vector<8x32xbf16>
    %c0_13 = arith.constant 0 : index
    %c0_14 = arith.constant 0 : index
    %c0_15 = arith.constant 0 : index
    %21 = vector.load %arg7[%c0_13, %c0_14, %c0_15] : memref<1x8x32xbf16, #tpu.memory_space<vmem>>, vector<1x8x32xbf16>
    %22 = vector.shape_cast %21 : vector<1x8x32xbf16> to vector<8x32xbf16>
    %23 = vector.shape_cast %20 : vector<8x32xbf16> to vector<1x8x32xbf16>
    tpu.vector_store %arg7[%c0_13, %c0_14, %c0_15], %23 {strides = array<i32>} : memref<1x8x32xbf16, #tpu.memory_space<vmem>>, vector<1x8x32xbf16>,
    return
  }
  func.func @transform_0(%arg0: i32, %arg1: i32) -> (i32, i32, i32) {
    %c0_i32 = arith.constant 0 : i32
    %c0_i32_0 = arith.constant 0 : i32
    return %arg0, %arg1, %c0_i32 : i32, i32, i32
  }
  func.func @transform_1(%arg0: i32, %arg1: i32) -> (i32, i32) {
    %c0_i32 = arith.constant 0 : i32
    %c0_i32_0 = arith.constant 0 : i32
    %c0_i32_1 = arith.constant 0 : i32
    return %c0_i32, %c0_i32_0 : i32, i32
  }
  func.func @transform_2(%arg0: i32, %arg1: i32) -> (i32, i32) {
    %c0_i32 = arith.constant 0 : i32
    %c0_i32_0 = arith.constant 0 : i32
    %c0_i32_1 = arith.constant 0 : i32
    return %c0_i32, %c0_i32_0 : i32, i32
  }
  func.func @transform_3(%arg0: i32, %arg1: i32) -> (i32, i32, i32) {
    %c0_i32 = arith.constant 0 : i32
    %c0_i32_0 = arith.constant 0 : i32
    return %arg0, %arg1, %c0_i32 : i32, i32, i32
  }
  func.func @transform_4(%arg0: i32, %arg1: i32) -> (i32, i32, i32) {
    %c0_i32 = arith.constant 0 : i32
    %c0_i32_0 = arith.constant 0 : i32
    return %arg0, %arg1, %c0_i32 : i32, i32, i32
  }
  func.func @transform_5(%arg0: i32, %arg1: i32) -> (i32, i32, i32) {
    %c0_i32 = arith.constant 0 : i32
    %c0_i32_0 = arith.constant 0 : i32
    return %arg0, %arg1, %c0_i32 : i32, i32, i32
  }
}

</mosaic_0001>

<llo_original>
// kernel: tpu_custom_call.1
$region0: #{tpu_custom_call.1}
  #allocation0 [shape = 'u32[]', space=smem, size = 0x4, offset = 0x4, fixed_abs, tag = 'smem constant byte address 0x4 - core index']
  #allocation1 [shape = 'u32[72,128]{1,0:T(1,128)}', space=vmem, size = 0x9000, scoped, tag = 'internal scratch']
  %s0 = inlined_call_operand.hbm [shape: bf16[2,8,32], index: 0, kind: input, shape index: {}]
  %s1 = inlined_call_operand.hbm [shape: bf16[32,96], index: 1, kind: input, shape index: {}]
  %s2 = inlined_call_operand.vmem [shape: f32[1,96], index: 2, kind: input, shape index: {}]
  %s3 = inlined_call_operand.hbm [shape: bf16[2,8,32], index: 3, kind: output, shape index: {0}]
  %s4 = inlined_call_operand.hbm [shape: bf16[2,8,32], index: 4, kind: output, shape index: {1}]
  %s5 = inlined_call_operand.hbm [shape: bf16[2,8,32], index: 5, kind: output, shape index: {2}]
  %6 = xla_tuple %s3, %s4, %s5
  %s7 = sld [smem:[#allocation0]]
  $region69: #{tpu_custom_call.1} parent=0
    _
  %s9 = ssub.s32 1, %s7
  %s10 = scalar_select 0, %s9, %s7
  $region1: #{tpu_custom_call.1} parent=0
    #allocation2 [shape = 'u8[4096]{0}', space=vmem, size = 0x1000, scoped, tag = 'input window, operand 0']
    #allocation3 [shape = 's32[2]{0}', space=sflag, size = 0x8, scoped, tag = 'scoped memory for tpu_custom_call.1']
    #allocation4 [shape = 's32[2]{0}', space=sflag, size = 0x8, scoped, tag = 'scoped memory for tpu_custom_call.1']
    #allocation5 [shape = 'u8[8192]{0}', space=vmem, size = 0x2000, scoped, tag = 'input window, operand 1, single buffered']
    #allocation6 [shape = 's32[1]{0}', space=sflag, size = 0x4, scoped, tag = 'scoped memory for tpu_custom_call.1']
    #allocation7 [shape = 'u8[4096]{0}', space=vmem, size = 0x1000, scoped, tag = 'output window, operand 0']
    #allocation8 [shape = 'u8[4096]{0}', space=vmem, size = 0x1000, scoped, tag = 'output window, operand 1']
    #allocation9 [shape = 's32[2]{0}', space=sflag, size = 0x8, scoped, tag = 'scoped memory for tpu_custom_call.1']
    #allocation10 [shape = 'u8[4096]{0}', space=vmem, size = 0x1000, scoped, tag = 'output window, operand 2']
    %11 = vsyncpa [#allocation3], 0
    %s12 = scalar_lea.sflag [#allocation3], 1
    %13 = vsyncpa %s12, 0
    %14 = vsyncpa [#allocation6], 0
    %15 = vsyncpa [#allocation4], 0
    %s16 = scalar_lea.sflag [#allocation4], 1
    %17 = vsyncpa %s16, 0
    %18 = vsyncpa [#allocation9], 0
    %s19 = scalar_lea.sflag [#allocation9], 1
    %20 = vsyncpa %s19, 0
    loop: start=0, step=1, limit=4
    $region2: #{tpu_custom_call.1} parent=1 // loop_pre_header
      _
    $region3: #{tpu_custom_call.1} parent=1 // loop_header
      %s22 = sphi 0, %s26
      %p23 = scmp.ge.s32.totalorder %s22, 4
      %s29 = sphi 0, %s41
      %s30 = sphi 0, %s37
      %s31 = sphi 0, %s29
      %s32 = sphi 0, %s30
      %s33 = sphi 0, %s31
      %s34 = sphi 0, %s32
      %s46 = sphi 0, %s48
      %s49 = sphi 0, %s46
      %s50 = sphi 0, %s49
      %s66 = sphi 0, %s50
      %s70 = sphi 0, %s70
      %s72 = sphi 0, %s70
      %s73 = sphi 0, %s72
      %s87 = sphi 0, %s73
      %s91 = sphi 0, %s91
      %s93 = sphi 0, %s91
      %s94 = sphi 0, %s93
      %s108 = sphi 0, %s94
      %s116 = sphi 0, %s118
      %s119 = sphi 0, %s116
      %s120 = sphi 0, %s119
      %s136 = sphi 0, %s120
      %s144 = sphi 0, %s146
      %s147 = sphi 0, %s144
      %s148 = sphi 0, %s147
      %s164 = sphi 0, %s148
      %s172 = sphi 0, %s174
      %s175 = sphi 0, %s172
      %s176 = sphi 0, %s175
      %s192 = sphi 0, %s176
    $region4: #{tpu_custom_call.1} parent=1 // loop_header_branch
      %25 = sbr.rel (%p23) target = $region8
    $region5: #{tpu_custom_call.1} parent=1 // loop_body
      %s27 = ssub.s32 %s22, 1
      %s28 = ssub.s32 %s22, 2
      %s35 = sadd.s32 1, %s30
      %p36 = scmp.ge.s32.totalorder %s35, 1
      %s37 = scalar_select %p36, 0, %s35
      %s38 = sadd.s32 1, %s29
      %s39 = scalar_select %p36, %s38, %s29
      %p40 = scmp.ge.s32.totalorder %s39, 2
      %s41 = scalar_select %p40, 0, %s39
      %s42 = ssub.s32 %s29, %s41
      %s43 = ssub.s32 %s30, %s37
      %s44 = sor.u32 %s42, %s43
      %p45 = scmp.eq.s32.totalorder %s44, 0
      %s47 = sadd.s32 %s46, 1
      %s48 = scalar_select %p45, %s46, %s47
      %p51 = pneg %p45
      %p52 = scmp.eq.s32.totalorder %s22, 1
      %p53 = por %p51, %p52
      %p54 = scmp.ne.s32.totalorder %s46, %s49
      %p55 = scmp.eq.s32.totalorder %s22, 0
      %p56 = por %p54, %p55
      %p57 = scmp.ne.s32.totalorder %s46, %s49
      %p58 = scmp.eq.s32.totalorder %s27, 1
      %p59 = por %p57, %p58
      %p60 = scmp.ne.s32.totalorder %s49, %s50
      %p61 = scmp.eq.s32.totalorder %s27, 0
      %p62 = por %p60, %p61
      %p63 = scmp.ne.s32.totalorder %s49, %s50
      %p64 = scmp.eq.s32.totalorder %s28, 1
      %p65 = por %p63, %p64
      %p67 = scmp.ne.s32.totalorder %s50, %s66
      %p68 = scmp.eq.s32.totalorder %s28, 0
      %p69 = por %p67, %p68
      %s71 = sadd.s32 %s70, 1
      %p74 = scmp.eq.s32.totalorder %s22, 1
      %p75 = scmp.ne.s32.totalorder %s70, %s72
      %p76 = scmp.eq.s32.totalorder %s22, 0
      %p77 = por %p75, %p76
      %p78 = scmp.ne.s32.totalorder %s70, %s72
      %p79 = scmp.eq.s32.totalorder %s27, 1
      %p80 = por %p78, %p79
      %p81 = scmp.ne.s32.totalorder %s72, %s73
      %p82 = scmp.eq.s32.totalorder %s27, 0
      %p83 = por %p81, %p82
      %p84 = scmp.ne.s32.totalorder %s72, %s73
      %p85 = scmp.eq.s32.totalorder %s28, 1
      %p86 = por %p84, %p85
      %p88 = scmp.ne.s32.totalorder %s73, %s87
      %p89 = scmp.eq.s32.totalorder %s28, 0
      %p90 = por %p88, %p89
      %s92 = sadd.s32 %s91, 1
      %p95 = scmp.eq.s32.totalorder %s22, 1
      %p96 = scmp.ne.s32.totalorder %s91, %s93
      %p97 = scmp.eq.s32.totalorder %s22, 0
      %p98 = por %p96, %p97
      %p99 = scmp.ne.s32.totalorder %s91, %s93
      %p100 = scmp.eq.s32.totalorder %s27, 1
      %p101 = por %p99, %p100
      %p102 = scmp.ne.s32.totalorder %s93, %s94
      %p103 = scmp.eq.s32.totalorder %s27, 0
      %p104 = por %p102, %p103
      %p105 = scmp.ne.s32.totalorder %s93, %s94
      %p106 = scmp.eq.s32.totalorder %s28, 1
      %p107 = por %p105, %p106
      %p109 = scmp.ne.s32.totalorder %s94, %s108
      %p110 = scmp.eq.s32.totalorder %s28, 0
      %p111 = por %p109, %p110
      %s112 = ssub.s32 %s29, %s41
      %s113 = ssub.s32 %s30, %s37
      %s114 = sor.u32 %s112, %s113
      %p115 = scmp.eq.s32.totalorder %s114, 0
      %s117 = sadd.s32 %s116, 1
      %s118 = scalar_select %p115, %s116, %s117
      %p121 = pneg %p115
      %p122 = scmp.eq.s32.totalorder %s22, 1
      %p123 = por %p121, %p122
      %p124 = scmp.ne.s32.totalorder %s116, %s119
      %p125 = scmp.eq.s32.totalorder %s22, 0
      %p126 = por %p124, %p125
      %p127 = scmp.ne.s32.totalorder %s116, %s119
      %p128 = scmp.eq.s32.totalorder %s27, 1
      %p129 = por %p127, %p128
      %p130 = scmp.ne.s32.totalorder %s119, %s120
      %p131 = scmp.eq.s32.totalorder %s27, 0
      %p132 = por %p130, %p131
      %p133 = scmp.ne.s32.totalorder %s119, %s120
      %p134 = scmp.eq.s32.totalorder %s28, 1
      %p135 = por %p133, %p134
      %p137 = scmp.ne.s32.totalorder %s120, %s136
      %p138 = scmp.eq.s32.totalorder %s28, 0
      %p139 = por %p137, %p138
      %s140 = ssub.s32 %s29, %s41
      %s141 = ssub.s32 %s30, %s37
      %s142 = sor.u32 %s140, %s141
      %p143 = scmp.eq.s32.totalorder %s142, 0
      %s145 = sadd.s32 %s144, 1
      %s146 = scalar_select %p143, %s144, %s145
      %p149 = pneg %p143
      %p150 = scmp.eq.s32.totalorder %s22, 1
      %p151 = por %p149, %p150
      %p152 = scmp.ne.s32.totalorder %s144, %s147
      %p153 = scmp.eq.s32.totalorder %s22, 0
      %p154 = por %p152, %p153
      %p155 = scmp.ne.s32.totalorder %s144, %s147
      %p156 = scmp.eq.s32.totalorder %s27, 1
      %p157 = por %p155, %p156
      %p158 = scmp.ne.s32.totalorder %s147, %s148
      %p159 = scmp.eq.s32.totalorder %s27, 0
      %p160 = por %p158, %p159
      %p161 = scmp.ne.s32.totalorder %s147, %s148
      %p162 = scmp.eq.s32.totalorder %s28, 1
      %p163 = por %p161, %p162
      %p165 = scmp.ne.s32.totalorder %s148, %s164
      %p166 = scmp.eq.s32.totalorder %s28, 0
      %p167 = por %p165, %p166
      %s168 = ssub.s32 %s29, %s41
      %s169 = ssub.s32 %s30, %s37
      %s170 = sor.u32 %s168, %s169
      %p171 = scmp.eq.s32.totalorder %s170, 0
      %s173 = sadd.s32 %s172, 1
      %s174 = scalar_select %p171, %s172, %s173
      %p177 = pneg %p171
      %p178 = scmp.eq.s32.totalorder %s22, 1
      %p179 = por %p177, %p178
      %p180 = scmp.ne.s32.totalorder %s172, %s175
      %p181 = scmp.eq.s32.totalorder %s22, 0
      %p182 = por %p180, %p181
      %p183 = scmp.ne.s32.totalorder %s172, %s175
      %p184 = scmp.eq.s32.totalorder %s27, 1
      %p185 = por %p183, %p184
      %p186 = scmp.ne.s32.totalorder %s175, %s176
      %p187 = scmp.eq.s32.totalorder %s27, 0
      %p188 = por %p186, %p187
      %p189 = scmp.ne.s32.totalorder %s175, %s176
      %p190 = scmp.eq.s32.totalorder %s28, 1
      %p191 = por %p189, %p190
      %p193 = scmp.ne.s32.totalorder %s176, %s192
      %p194 = scmp.eq.s32.totalorder %s28, 0
      %p195 = por %p193, %p194
      %p196 = scmp.le.s32.totalorder 1, %s22
      %p197 = scmp.lt.s32.totalorder %s22, 3
      %p198 = pnand %p196, %p197
      %p199 = pneg %p198
      // Predicated region
      $region9: #{tpu_custom_call.1} parent=5 // pred_check
        _
      $region10: #{tpu_custom_call.1} parent=5 // pred_check_branch
        %201 = sbr.rel (%p198) target = $region12
      $region11: #{tpu_custom_call.1} parent=5 // pred_region
        %s202 = ssub.s32 %s22, 1
        // Predicated region
        $region13: #{tpu_custom_call.1} parent=11 // pred_check
          %p203 = pneg %p83
        $region14: #{tpu_custom_call.1} parent=11 // pred_check_branch
          %205 = sbr.rel (%p203) target = $region16
        $region15: #{tpu_custom_call.1} parent=11 // pred_region
          %207 = vsyncadd [#allocation6], 0
          %s208 = sshll.u32 %s1, 4
          %s209 = int_to_ptr.hbm [resolvable:$true] %s208
          %s210 = sshll.u32 [#allocation5], 4
          %s211 = int_to_ptr.vmem [resolvable:$true] %s210
          %216 = dma.hbm_to_vmem [thread:$0]  %s209, 256, %s211, [#allocation6], 64, 64, 4
        $region16: #{tpu_custom_call.1} parent=11 // pred_fallthru
          _
        // Predicated region
        $region17: #{tpu_custom_call.1} parent=11 // pred_check
          %p217 = pneg %p104
        $region18: #{tpu_custom_call.1} parent=11 // pred_check_branch
          %219 = sbr.rel (%p217) target = $region20
        $region19: #{tpu_custom_call.1} parent=11 // pred_region
          _
        $region20: #{tpu_custom_call.1} parent=11 // pred_fallthru
          _
      $region12: #{tpu_custom_call.1} parent=5 // pred_fallthru
        _
      %p220 = scmp.lt.s32.totalorder %s22, 2
      // Predicated region
      $region21: #{tpu_custom_call.1} parent=5 // pred_check
        %p221 = pneg %p220
      $region22: #{tpu_custom_call.1} parent=5 // pred_check_branch
        %223 = sbr.rel (%p221) target = $region24
      $region23: #{tpu_custom_call.1} parent=5 // pred_region
        // Predicated region
        $region25: #{tpu_custom_call.1} parent=23 // pred_check
          %p224 = pneg %p56
        $region26: #{tpu_custom_call.1} parent=23 // pred_check_branch
          %226 = sbr.rel (%p224) target = $region28
        $region27: #{tpu_custom_call.1} parent=23 // pred_region
          %s227 = sand.u32 %s46, 1
          %s228 = scalar_lea.sflag [#allocation3], %s227
          %s229 = sand.u32 %s46, 1
          %s230 = smul.addr %s229, 4
          %s231 = scalar_lea.vmem [#allocation2], %s230
          %233 = vsyncadd %s228, 0
          %s234 = sadd.s32 %s30, %s29
          %s235 = smul.addr %s234, 4
          %s236 = scalar_lea.hbm %s0, %s235
          %s238 = sshll.u32 %s236, 4
          %s239 = int_to_ptr.hbm [resolvable:$true] %s238
          %s240 = sshll.u32 %s231, 4
          %s241 = int_to_ptr.vmem [resolvable:$true] %s240
          %243 = dma.hbm_to_vmem [thread:$0]  %s239, 64, %s241, %s228
        $region28: #{tpu_custom_call.1} parent=23 // pred_fallthru
          _
      $region24: #{tpu_custom_call.1} parent=5 // pred_fallthru
        _
      %p244 = scmp.le.s32.totalorder 1, %s22
      %p245 = scmp.lt.s32.totalorder %s22, 3
      %p246 = pnand %p244, %p245
      %p247 = pneg %p246
      // Predicated region
      $region29: #{tpu_custom_call.1} parent=5 // pred_check
        _
      $region30: #{tpu_custom_call.1} parent=5 // pred_check_branch
        %249 = sbr.rel (%p246) target = $region32
      $region31: #{tpu_custom_call.1} parent=5 // pred_region
        %s250 = ssub.s32 %s22, 1
        %s251 = sand.u32 %s49, 1
        %s252 = scalar_lea.sflag [#allocation3], %s251
        %s253 = sand.u32 %s49, 1
        %s254 = smul.addr %s253, 4
        %s255 = scalar_lea.vmem [#allocation2], %s254
        // Predicated region
        $region33: #{tpu_custom_call.1} parent=31 // pred_check
          %p256 = pneg %p62
        $region34: #{tpu_custom_call.1} parent=31 // pred_check_branch
          %258 = sbr.rel (%p256) target = $region36
        $region35: #{tpu_custom_call.1} parent=31 // pred_region
          %260 = dma.done %s252, 64
        $region36: #{tpu_custom_call.1} parent=31 // pred_fallthru
          _
        // Predicated region
        $region37: #{tpu_custom_call.1} parent=31 // pred_check
          %p261 = pneg %p83
        $region38: #{tpu_custom_call.1} parent=31 // pred_check_branch
          %263 = sbr.rel (%p261) target = $region40
        $region39: #{tpu_custom_call.1} parent=31 // pred_region
          %265 = dma.done [#allocation6], 256
        $region40: #{tpu_custom_call.1} parent=31 // pred_fallthru
          _
        %s266 = sand.u32 %s49, 1
        %s267 = scalar_lea.sflag [#allocation3], %s266
        %s268 = sand.u32 %s49, 1
        %s269 = smul.addr %s268, 4
        %s270 = scalar_lea.vmem [#allocation2], %s269
        %p271 = pneg %p62
        %p272 = pneg %p59
        %p273 = pneg %p83
        %p274 = pneg %p80
        %p275 = pneg %p104
        %p276 = pneg %p101
        %p277 = pneg %p132
        %p278 = pneg %p129
        %s279 = sand.u32 %s119, 1
        %s280 = scalar_lea.sflag [#allocation4], %s279
        %s281 = sand.u32 %s119, 1
        %s282 = smul.addr %s281, 4
        %s283 = scalar_lea.vmem [#allocation7], %s282
        %p284 = pneg %p160
        %p285 = pneg %p157
        %s286 = sand.u32 %s27, 1
        %s287 = scalar_lea.sflag [#allocation9], %s286
        %s288 = sand.u32 %s147, 1
        %s289 = smul.addr %s288, 4
        %s290 = scalar_lea.vmem [#allocation8], %s289
        %p291 = pneg %p188
        %p292 = pneg %p185
        %s293 = sand.u32 %s27, 1
        %s294 = scalar_lea.sflag [#allocation9], %s293
        %s295 = sand.u32 %s175, 1
        %s296 = smul.addr %s295, 4
        %s297 = scalar_lea.vmem [#allocation10], %s296
        %v299 = vld [vmem:[%s255] sm:$0xf]
        %v300 = vld [vmem:[#allocation5] sm:$0xf]
        %v301 = vld [vmem:[#allocation5 + $0x4] sm:$0xf]
        %v302 = vld [vmem:[#allocation5 + $0x8] sm:$0xf]
        %v303 = vld [vmem:[#allocation5 + $0xc] sm:$0xf]
        %v304 = vld [vmem:[%s2] sm:$0x1]
        %v306 = vperm.slane %v304, 0
        %v312 = vunpack.c.l.b16 %v300
        %v313 = vunpack.c.l.b16 %v301
        %v314 = vunpack.c.l.b16 %v302
        %v315 = vunpack.c.l.b16 %v303
        %v316 = vpack.c.b16 %v313, %v312
        %v317 = vpack.c.b16 %v315, %v314
        %vm320 = vcmask 261120
        %v322 = vsel %vm320, %v299, 0
        %324 = vmatpush.bf16.msra.mxu0 0
        %325 = vmatpush.bf16.msra.mxu0 0
        %326 = vmatpush.bf16.msra.mxu0 0
        %327 = vmatpush.bf16.msra.mxu0 0
        %328 = vmatpush.bf16.msra.mxu0 0
        %329 = vmatpush.bf16.msra.mxu0 0
        %330 = vmatpush.bf16.msra.mxu0 %v317
        %331 = vmatpush.bf16.msra.mxu0 %v316
        %332 = vmatmul.bf16.gmra.mxu0 %v322
        %v333 = vpop.f32.mrf.mxu0
        %v334 = vadd.f32 %v306, %v333
        %v335 = vpop.f32.mrf.mxu0
        %336 = vdwg.mxu0
        %v337 = vmul.f32 %v334, 0.17677669
        %v338 = vpack.c.bf16 %v337, %v337
        %vm339 = vcmask 257024
        %340 = vst.msk [vmem:[%s283] sm:$0xf] %vm339, %v338
        %v341 = vpack.c.bf16 %v334, %v334
        %343 = vrot.lane.b32.xlu0 %v341, 96
        %v344 = vpop.permute.xlu0 %343
        %346 = vst.msk [vmem:[%s290] sm:$0xf] %vm339, %v344
        %347 = vrot.lane.b32.xlu0 %v341, 64
        %v348 = vpop.permute.xlu0 %347
        %350 = vst.msk [vmem:[%s297] sm:$0xf] %vm339, %v348
        %s351 = sand.u32 %s119, 1
        %s352 = scalar_lea.sflag [#allocation4], %s351
        %s353 = sand.u32 %s119, 1
        %s354 = smul.addr %s353, 4
        %s355 = scalar_lea.vmem [#allocation7], %s354
        %s356 = sand.u32 %s27, 1
        %s357 = scalar_lea.sflag [#allocation9], %s356
        %s358 = sand.u32 %s147, 1
        %s359 = smul.addr %s358, 4
        %s360 = scalar_lea.vmem [#allocation8], %s359
        %s361 = sand.u32 %s27, 1
        %s362 = scalar_lea.sflag [#allocation9], %s361
        %s363 = sand.u32 %s175, 1
        %s364 = smul.addr %s363, 4
        %s365 = scalar_lea.vmem [#allocation10], %s364
        // Predicated region
        $region41: #{tpu_custom_call.1} parent=31 // pred_check
          %p366 = pneg %p129
        $region42: #{tpu_custom_call.1} parent=31 // pred_check_branch
          %368 = sbr.rel (%p366) target = $region44
        $region43: #{tpu_custom_call.1} parent=31 // pred_region
          %370 = vsyncadd %s352, 0
          %s371 = sadd.s32 %s32, %s31
          %s372 = smul.addr %s371, 4
          %s373 = scalar_lea.hbm %s3, %s372
          %s375 = sshll.u32 %s355, 4
          %s376 = int_to_ptr.vmem [resolvable:$true] %s375
          %s377 = sshll.u32 %s373, 4
          %s378 = int_to_ptr.hbm [resolvable:$true] %s377
          %380 = dma.vmem_to_hbm [thread:$0]  %s376, 64, %s378, %s352
        $region44: #{tpu_custom_call.1} parent=31 // pred_fallthru
          _
        // Predicated region
        $region45: #{tpu_custom_call.1} parent=31 // pred_check
          %p381 = pneg %p157
        $region46: #{tpu_custom_call.1} parent=31 // pred_check_branch
          %383 = sbr.rel (%p381) target = $region48
        $region47: #{tpu_custom_call.1} parent=31 // pred_region
          %385 = vsyncadd %s357, 0
          %s386 = sadd.s32 %s32, %s31
          %s387 = smul.addr %s386, 4
          %s388 = scalar_lea.hbm %s4, %s387
          %s390 = sshll.u32 %s360, 4
          %s391 = int_to_ptr.vmem [resolvable:$true] %s390
          %s392 = sshll.u32 %s388, 4
          %s393 = int_to_ptr.hbm [resolvable:$true] %s392
          %395 = dma.vmem_to_hbm [thread:$0]  %s391, 64, %s393, %s357
        $region48: #{tpu_custom_call.1} parent=31 // pred_fallthru
          _
        // Predicated region
        $region49: #{tpu_custom_call.1} parent=31 // pred_check
          %p396 = pneg %p185
        $region50: #{tpu_custom_call.1} parent=31 // pred_check_branch
          %398 = sbr.rel (%p396) target = $region52
        $region51: #{tpu_custom_call.1} parent=31 // pred_region
          %400 = vsyncadd %s362, 0
          %s401 = sadd.s32 %s32, %s31
          %s402 = smul.addr %s401, 4
          %s403 = scalar_lea.hbm %s5, %s402
          %s405 = sshll.u32 %s365, 4
          %s406 = int_to_ptr.vmem [resolvable:$true] %s405
          %s407 = sshll.u32 %s403, 4
          %s408 = int_to_ptr.hbm [resolvable:$true] %s407
          %410 = dma.vmem_to_hbm [thread:$0]  %s406, 64, %s408, %s362
        $region52: #{tpu_custom_call.1} parent=31 // pred_fallthru
          _
      $region32: #{tpu_custom_call.1} parent=5 // pred_fallthru
        _
      %p411 = scmp.le.s32.totalorder 2, %s22
      // Predicated region
      $region53: #{tpu_custom_call.1} parent=5 // pred_check
        %p412 = pneg %p411
      $region54: #{tpu_custom_call.1} parent=5 // pred_check_branch
        %414 = sbr.rel (%p412) target = $region56
      $region55: #{tpu_custom_call.1} parent=5 // pred_region
        %s415 = ssub.s32 %s22, 2
        // Predicated region
        $region57: #{tpu_custom_call.1} parent=55 // pred_check
          %p416 = pneg %p135
        $region58: #{tpu_custom_call.1} parent=55 // pred_check_branch
          %418 = sbr.rel (%p416) target = $region60
        $region59: #{tpu_custom_call.1} parent=55 // pred_region
          %s419 = sand.u32 %s120, 1
          %s420 = scalar_lea.sflag [#allocation4], %s419
          %s421 = sand.u32 %s120, 1
          %s422 = smul.addr %s421, 4
          %s423 = scalar_lea.vmem [#allocation7], %s422
          %425 = dma.done %s420, 64
        $region60: #{tpu_custom_call.1} parent=55 // pred_fallthru
          _
        // Predicated region
        $region61: #{tpu_custom_call.1} parent=55 // pred_check
          %p426 = pneg %p163
        $region62: #{tpu_custom_call.1} parent=55 // pred_check_branch
          %428 = sbr.rel (%p426) target = $region64
        $region63: #{tpu_custom_call.1} parent=55 // pred_region
          %s429 = sand.u32 %s28, 1
          %s430 = scalar_lea.sflag [#allocation9], %s429
          %s431 = sand.u32 %s148, 1
          %s432 = smul.addr %s431, 4
          %s433 = scalar_lea.vmem [#allocation8], %s432
          %435 = dma.done %s430, 64
        $region64: #{tpu_custom_call.1} parent=55 // pred_fallthru
          _
        // Predicated region
        $region65: #{tpu_custom_call.1} parent=55 // pred_check
          %p436 = pneg %p191
        $region66: #{tpu_custom_call.1} parent=55 // pred_check_branch
          %438 = sbr.rel (%p436) target = $region68
        $region67: #{tpu_custom_call.1} parent=55 // pred_region
          %s439 = sand.u32 %s28, 1
          %s440 = scalar_lea.sflag [#allocation9], %s439
          %s441 = sand.u32 %s176, 1
          %s442 = smul.addr %s441, 4
          %s443 = scalar_lea.vmem [#allocation10], %s442
          %445 = dma.done %s440, 64
        $region68: #{tpu_custom_call.1} parent=55 // pred_fallthru
          _
      $region56: #{tpu_custom_call.1} parent=5 // pred_fallthru
        _
    $region6: #{tpu_custom_call.1} parent=1 // loop_footer
      %s26 = sadd.s32 1, %s22
    $region7: #{tpu_custom_call.1} parent=1 // loop_footer_branch
      %21 = sbr.rel target = $region3
    $region8: #{tpu_custom_call.1} parent=1 // loop_exit
      _
    %446 = vsyncpa [#allocation3], 1
    %s447 = scalar_lea.sflag [#allocation3], 1
    %448 = vsyncpa %s447, 1
    %449 = vsyncpa [#allocation6], 1
    %450 = vsyncpa [#allocation4], 1
    %s451 = scalar_lea.sflag [#allocation4], 1
    %452 = vsyncpa %s451, 1
    %453 = vsyncpa [#allocation9], 1
    %s454 = scalar_lea.sflag [#allocation9], 1
    %455 = vsyncpa %s454, 1

</llo_original>
